<compile_context>
chip_gen: v7x
topology: tpu7x:2x2x1
jax: 0.10.0
libtpu: 0.0.40
codegen_flags: <defaults>
</compile_context>

<pallas_src>
import functools

import jax
import jax.numpy as jnp
from jax.experimental import pallas as pl
from jax.experimental.pallas import tpu as pltpu

NORMALIZATION = ((0.485, 0.456, 0.406), (0.229, 0.224, 0.225))


def _pick_batch_tile(batch, cap=8):
    """Largest tile <= cap dividing batch, while keeping >=2 grid steps (megacore)."""
    bt = min(cap, batch)
    while batch % bt:
        bt -= 1
    if batch // bt < 2 and bt > 1:
        bt2 = bt // 2
        while bt2 > 1 and batch % bt2:
            bt2 -= 1
        bt = max(1, bt2)
    return bt


# ---------------------------------------------------------------------------
# Fused kernel (one grid step = `bt` whole images):
#   strided patch pooling (two selector matmuls, token mean folded in)
#   -> patch-embed matmul (+folded Normalize) -> projector Linear.
# ---------------------------------------------------------------------------
def _encoder_fused_kernel(x_ref, l_ref, sel_ref, a_ref, bpe_ref, wpt_ref, bpt_ref,
                          pooled_ref, proj_ref, *, bt, patch):
    # x_ref      : (bt, C*H, W)  bf16  raw image rows, row index r = (c, h)
    # l_ref      : (C*P, C*H)    bf16  0/1 row-patch selector (per-channel block diag)
    # sel_ref    : (P, W, 1)     f32   0/1 column-patch selector columns
    # a_ref      : (P, G, C*P)   f32   patch-embed weight with (1/std)/N folded in
    # bpe_ref    : (G, 1)        f32   patch-embed bias with Normalize shift folded in
    # wpt_ref    : (E, G)        f32   projector weight (transposed)
    # bpt_ref    : (E, 1)        f32   projector bias (column)
    # pooled_ref : (bt, G, 1)    f32   output: pooled feature
    # proj_ref   : (bt, E, 1)    f32   output: projected feature
    l = l_ref[...]
    bpe = bpe_ref[...]
    wpt = wpt_ref[...]
    bpt = bpt_ref[...]

    for b in range(bt):                       # static unroll over images in the block
        m = x_ref[b]                          # (C*H, W) bf16
        # Row-patch sum: y[(c,ph), w] = sum_{nh} x[c, nh*P+ph, w]   (bf16 MXU, f32 acc)
        y = jnp.dot(l, m, preferred_element_type=jnp.float32)        # (C*P, W)

        f = bpe                               # (G, 1) running pooled feature
        for pw in range(patch):
            # Column-patch sum: z[(c,ph)] = sum_{nw} y[(c,ph), nw*P+pw]
            z = jnp.dot(y, sel_ref[pw], preferred_element_type=jnp.float32)   # (C*P, 1)
            # Patch-embed contribution for this pw (scale & 1/N already folded into A)
            f = f + jnp.dot(a_ref[pw], z, preferred_element_type=jnp.float32)  # (G, 1)

        pooled_ref[b] = f
        proj_ref[b] = jnp.dot(wpt, f, preferred_element_type=jnp.float32) + bpt


def encoder_forward(x, params, *, patch=4, batch_tile=8):
    """x: (B, 3, H, W) float32 in [0,1]. Returns (proj, feat_pooled)."""
    B, C, H, W = x.shape
    P = patch
    assert H % P == 0 and W % P == 0
    nH, nW = H // P, W // P
    N = nH * nW
    G = params["w_pe"].shape[1]
    E = params["w_proj"].shape[1]

    mean = jnp.asarray(NORMALIZATION[0], jnp.float32)
    std = jnp.asarray(NORMALIZATION[1], jnp.float32)

    # --- constant 0/1 selector matrices (exact in bf16/f32) ------------------
    rows = jnp.arange(C * P)                  # (c, ph)
    cols = jnp.arange(C * H)                  # (c, h)
    L = ((rows[:, None] // P == cols[None, :] // H)
         & ((cols[None, :] % H) % P == rows[:, None] % P)).astype(jnp.bfloat16)
    Sel3 = (jnp.arange(W)[None, :, None] % P
            == jnp.arange(P)[:, None, None]).astype(jnp.float32)      # (P, W, 1)

    # --- fold Normalize scale and the 1/N token mean into the patch-embed weight ---
    # A[pw, g, (c,ph)] = (1 / (std[c] * N)) * w_pe[(c,ph,pw), g]
    scale_cp = jnp.repeat(1.0 / std, P)                                # (C*P,)
    w3 = params["w_pe"].astype(jnp.float32).reshape(C * P, P, G)
    A = jnp.transpose(w3, (1, 2, 0)) * (scale_cp / N)[None, None, :]   # (P, G, C*P)

    # --- fold Normalize shift into the patch-embed bias (token-independent) ---
    shift = jnp.repeat(-mean / std, P * P)                             # (D,)
    b_pe_col = (shift @ params["w_pe"] + params["b_pe"][0]).reshape(G, 1)

    w_proj_t = params["w_proj"].T.astype(jnp.float32)                  # (E, G)
    b_proj_col = params["b_proj"].reshape(E, 1).astype(jnp.float32)    # (E, 1)

    # --- glue: FREE contiguous reshape + bf16 cast of the streamed input -----
    # (in a real pipeline the bf16 cast fuses into the producer -> halves HBM reads)
    x2 = x.reshape(B, C * H, W).astype(jnp.bfloat16)

    bt = _pick_batch_tile(B, batch_tile)
    grid = (B // bt,)

    kernel = functools.partial(_encoder_fused_kernel, bt=bt, patch=P)

    pooled_c, proj_c = pl.pallas_call(
        kernel,
        out_shape=(
            jax.ShapeDtypeStruct((B, G, 1), jnp.float32),
            jax.ShapeDtypeStruct((B, E, 1), jnp.float32),
        ),
        grid=grid,
        in_specs=[
            pl.BlockSpec((bt, C * H, W), lambda i: (i, 0, 0)),
            pl.BlockSpec((C * P, C * H), lambda i: (0, 0)),
            pl.BlockSpec((P, W, 1), lambda i: (0, 0, 0)),
            pl.BlockSpec((P, G, C * P), lambda i: (0, 0, 0)),
            pl.BlockSpec((G, 1), lambda i: (0, 0)),
            pl.BlockSpec((E, G), lambda i: (0, 0)),
            pl.BlockSpec((E, 1), lambda i: (0, 0)),
        ],
        out_specs=(
            pl.BlockSpec((bt, G, 1), lambda i: (i, 0, 0)),
            pl.BlockSpec((bt, E, 1), lambda i: (i, 0, 0)),
        ),
        compiler_params=pltpu.CompilerParams(
            dimension_semantics=("parallel",),
            # v5e scoped default is only 16 MiB; 48 MiB still leaves headroom on
            # v7x's 64 MiB physical VMEM.  Blocks here are only ~100s of KiB.
            vmem_limit_bytes=48 * 1024 * 1024,
        ),
    )(x2, L, Sel3, A, b_pe_col, w_proj_t, b_proj_col)

    proj = proj_c[:, :, 0]
    pooled = pooled_c[:, :, 0]
    # Encoder.forward returns (self.projector(feat), feat) with feat already pooled
    return proj, pooled


def _reference(x, params, patch=4):
    """Pure-JAX f32 reference mirroring the PyTorch semantics."""
    B, C, H, W = x.shape
    P = patch
    mean = jnp.asarray(NORMALIZATION[0], jnp.float32).reshape(1, C, 1, 1)
    std = jnp.asarray(NORMALIZATION[1], jnp.float32).reshape(1, C, 1, 1)
    xn = (x - mean) / std                                        # Normalize
    nH, nW = H // P, W // P
    xp = xn.reshape(B, C, nH, P, nW, P)
    xp = jnp.transpose(xp, (0, 2, 4, 1, 3, 5)).reshape(B, nH * nW, C * P * P)
    feat = xp @ params["w_pe"] + params["b_pe"]                  # synthetic backbone
    pooled = feat.mean(axis=1)                                   # MeanPolling
    proj = pooled @ params["w_proj"] + params["b_proj"]          # projector Linear
    return proj, pooled


if __name__ == "__main__":
    # Small shapes: B=2, C=3, H=W=16, patch=4 -> N=16 tokens, gap_dim=32, emb_dim=32
    B, C, H, W = 2, 3, 16, 16
    P = 4
    D = C * P * P
    GAP_DIM = 32
    EMB_DIM = 32

    key = jax.random.PRNGKey(0)
    kx, k1, k2, k3, k4 = jax.random.split(key, 5)

    x = jax.random.uniform(kx, (B, C, H, W), dtype=jnp.float32)  # float image in [0,1]

    params = {
        "w_pe": 0.05 * jax.random.normal(k1, (D, GAP_DIM), dtype=jnp.float32),
        "b_pe": 0.01 * jax.random.normal(k2, (1, GAP_DIM), dtype=jnp.float32),
        "w_proj": 0.05 * jax.random.normal(k3, (GAP_DIM, EMB_DIM), dtype=jnp.float32),
        "b_proj": 0.01 * jax.random.normal(k4, (1, EMB_DIM), dtype=jnp.float32),
    }

    proj, feat = encoder_forward(x, params, patch=P)
    jax.block_until_ready((proj, feat))

    ref_proj, ref_feat = _reference(x, params, patch=P)
    assert proj.shape == (B, EMB_DIM) and feat.shape == (B, GAP_DIM)
    # Tolerance loosened vs. the pure-f32 version because the image is streamed in bf16
    # (accumulation stays f32).
    assert jnp.allclose(proj, ref_proj, atol=3e-2, rtol=3e-2)
    assert jnp.allclose(feat, ref_feat, atol=3e-2, rtol=3e-2)

    print("KERNEL_OK")
</pallas_src>

<mosaic_0001>
module attributes {stable_mosaic.version = 11 : i64} {
  func.func @_encoder_fused_kernel(%arg0: i32, %arg1: memref<1x48x16xbf16, #tpu.memory_space<vmem>>, %arg2: memref<12x48xbf16, #tpu.memory_space<vmem>>, %arg3: memref<4x16x1xf32, #tpu.memory_space<vmem>>, %arg4: memref<4x32x12xf32, #tpu.memory_space<vmem>>, %arg5: memref<32x1xf32, #tpu.memory_space<vmem>>, %arg6: memref<32x32xf32, #tpu.memory_space<vmem>>, %arg7: memref<32x1xf32, #tpu.memory_space<vmem>>, %arg8: memref<1x32x1xf32, #tpu.memory_space<vmem>>, %arg9: memref<1x32x1xf32, #tpu.memory_space<vmem>>) attributes {dimension_semantics = [#tpu.dimension_semantics<parallel>], iteration_bounds = array<i64: 2>, scalar_prefetch = 0 : i64, scratch_operands = 0 : i64, tpu.core_type = #tpu.core_type<tc>, window_params = [{transform_indices = @transform_0, window_bounds = array<i64: 1, 48, 16>}, {pipeline_mode = #tpu.pipeline_mode<synchronous>, transform_indices = @transform_1, window_bounds = array<i64: 12, 48>}, {pipeline_mode = #tpu.pipeline_mode<synchronous>, transform_indices = @transform_2, window_bounds = array<i64: 4, 16, 1>}, {pipeline_mode = #tpu.pipeline_mode<synchronous>, transform_indices = @transform_3, window_bounds = array<i64: 4, 32, 12>}, {pipeline_mode = #tpu.pipeline_mode<synchronous>, transform_indices = @transform_4, window_bounds = array<i64: 32, 1>}, {pipeline_mode = #tpu.pipeline_mode<synchronous>, transform_indices = @transform_5, window_bounds = array<i64: 32, 32>}, {pipeline_mode = #tpu.pipeline_mode<synchronous>, transform_indices = @transform_6, window_bounds = array<i64: 32, 1>}, {transform_indices = @transform_7, window_bounds = array<i64: 1, 32, 1>}, {transform_indices = @transform_8, window_bounds = array<i64: 1, 32, 1>}]} {
    %c0 = arith.constant 0 : index
    %c0_0 = arith.constant 0 : index
    %0 = vector.load %arg2[%c0, %c0_0] : memref<12x48xbf16, #tpu.memory_space<vmem>>, vector<12x48xbf16>
    %c0_1 = arith.constant 0 : index
    %c0_2 = arith.constant 0 : index
    %1 = vector.load %arg5[%c0_1, %c0_2] : memref<32x1xf32, #tpu.memory_space<vmem>>, vector<32x1xf32>
    %c0_3 = arith.constant 0 : index
    %c0_4 = arith.constant 0 : index
    %2 = vector.load %arg6[%c0_3, %c0_4] : memref<32x32xf32, #tpu.memory_space<vmem>>, vector<32x32xf32>
    %c0_5 = arith.constant 0 : index
    %c0_6 = arith.constant 0 : index
    %3 = vector.load %arg7[%c0_5, %c0_6] : memref<32x1xf32, #tpu.memory_space<vmem>>, vector<32x1xf32>
    %c0_7 = arith.constant 0 : index
    %c0_8 = arith.constant 0 : index
    %c0_9 = arith.constant 0 : index
    %4 = vector.load %arg1[%c0_7, %c0_8, %c0_9] : memref<1x48x16xbf16, #tpu.memory_space<vmem>>, vector<1x48x16xbf16>
    %5 = vector.shape_cast %4 : vector<1x48x16xbf16> to vector<48x16xbf16>
    %cst = arith.constant dense<0.000000e+00> : vector<12x16xf32>
    %6 = tpu.matmul %0, %5, %cst {dimension_numbers = #tpu.dot_dimension_numbers<[1], [0], [0], [1], [0, 0, 1, 1], [], []>} : vector<12x48xbf16>, vector<48x16xbf16>, vector<12x16xf32> -> vector<12x16xf32>
    %c0_10 = arith.constant 0 : index
    %c0_11 = arith.constant 0 : index
    %c0_12 = arith.constant 0 : index
    %7 = vector.load %arg3[%c0_10, %c0_11, %c0_12] : memref<4x16x1xf32, #tpu.memory_space<vmem>>, vector<1x16x1xf32>
    %8 = vector.shape_cast %7 : vector<1x16x1xf32> to vector<16x1xf32>
    %cst_13 = arith.constant dense<0.000000e+00> : vector<12x1xf32>
    %9 = tpu.matmul %6, %8, %cst_13 {dimension_numbers = #tpu.dot_dimension_numbers<[1], [0], [0], [1], [0, 0, 1, 1], [], []>} : vector<12x16xf32>, vector<16x1xf32>, vector<12x1xf32> -> vector<12x1xf32>
    %c0_14 = arith.constant 0 : index
    %c0_15 = arith.constant 0 : index
    %c0_16 = arith.constant 0 : index
    %10 = vector.load %arg4[%c0_14, %c0_15, %c0_16] : memref<4x32x12xf32, #tpu.memory_space<vmem>>, vector<1x32x12xf32>
    %11 = vector.shape_cast %10 : vector<1x32x12xf32> to vector<32x12xf32>
    %cst_17 = arith.constant dense<0.000000e+00> : vector<32x1xf32>
    %12 = tpu.matmul %11, %9, %cst_17 {dimension_numbers = #tpu.dot_dimension_numbers<[1], [0], [0], [1], [0, 0, 1, 1], [], []>} : vector<32x12xf32>, vector<12x1xf32>, vector<32x1xf32> -> vector<32x1xf32>
    %13 = arith.addf %1, %12 : vector<32x1xf32>
    %c1 = arith.constant 1 : index
    %c0_18 = arith.constant 0 : index
    %c0_19 = arith.constant 0 : index
    %14 = vector.load %arg3[%c1, %c0_18, %c0_19] : memref<4x16x1xf32, #tpu.memory_space<vmem>>, vector<1x16x1xf32>
    %15 = vector.shape_cast %14 : vector<1x16x1xf32> to vector<16x1xf32>
    %cst_20 = arith.constant dense<0.000000e+00> : vector<12x1xf32>
    %16 = tpu.matmul %6, %15, %cst_20 {dimension_numbers = #tpu.dot_dimension_numbers<[1], [0], [0], [1], [0, 0, 1, 1], [], []>} : vector<12x16xf32>, vector<16x1xf32>, vector<12x1xf32> -> vector<12x1xf32>
    %c1_21 = arith.constant 1 : index
    %c0_22 = arith.constant 0 : index
    %c0_23 = arith.constant 0 : index
    %17 = vector.load %arg4[%c1_21, %c0_22, %c0_23] : memref<4x32x12xf32, #tpu.memory_space<vmem>>, vector<1x32x12xf32>
    %18 = vector.shape_cast %17 : vector<1x32x12xf32> to vector<32x12xf32>
    %cst_24 = arith.constant dense<0.000000e+00> : vector<32x1xf32>
    %19 = tpu.matmul %18, %16, %cst_24 {dimension_numbers = #tpu.dot_dimension_numbers<[1], [0], [0], [1], [0, 0, 1, 1], [], []>} : vector<32x12xf32>, vector<12x1xf32>, vector<32x1xf32> -> vector<32x1xf32>
    %20 = arith.addf %13, %19 : vector<32x1xf32>
    %c2 = arith.constant 2 : index
    %c0_25 = arith.constant 0 : index
    %c0_26 = arith.constant 0 : index
    %21 = vector.load %arg3[%c2, %c0_25, %c0_26] : memref<4x16x1xf32, #tpu.memory_space<vmem>>, vector<1x16x1xf32>
    %22 = vector.shape_cast %21 : vector<1x16x1xf32> to vector<16x1xf32>
    %cst_27 = arith.constant dense<0.000000e+00> : vector<12x1xf32>
    %23 = tpu.matmul %6, %22, %cst_27 {dimension_numbers = #tpu.dot_dimension_numbers<[1], [0], [0], [1], [0, 0, 1, 1], [], []>} : vector<12x16xf32>, vector<16x1xf32>, vector<12x1xf32> -> vector<12x1xf32>
    %c2_28 = arith.constant 2 : index
    %c0_29 = arith.constant 0 : index
    %c0_30 = arith.constant 0 : index
    %24 = vector.load %arg4[%c2_28, %c0_29, %c0_30] : memref<4x32x12xf32, #tpu.memory_space<vmem>>, vector<1x32x12xf32>
    %25 = vector.shape_cast %24 : vector<1x32x12xf32> to vector<32x12xf32>
    %cst_31 = arith.constant dense<0.000000e+00> : vector<32x1xf32>
    %26 = tpu.matmul %25, %23, %cst_31 {dimension_numbers = #tpu.dot_dimension_numbers<[1], [0], [0], [1], [0, 0, 1, 1], [], []>} : vector<32x12xf32>, vector<12x1xf32>, vector<32x1xf32> -> vector<32x1xf32>
    %27 = arith.addf %20, %26 : vector<32x1xf32>
    %c3 = arith.constant 3 : index
    %c0_32 = arith.constant 0 : index
    %c0_33 = arith.constant 0 : index
    %28 = vector.load %arg3[%c3, %c0_32, %c0_33] : memref<4x16x1xf32, #tpu.memory_space<vmem>>, vector<1x16x1xf32>
    %29 = vector.shape_cast %28 : vector<1x16x1xf32> to vector<16x1xf32>
    %cst_34 = arith.constant dense<0.000000e+00> : vector<12x1xf32>
    %30 = tpu.matmul %6, %29, %cst_34 {dimension_numbers = #tpu.dot_dimension_numbers<[1], [0], [0], [1], [0, 0, 1, 1], [], []>} : vector<12x16xf32>, vector<16x1xf32>, vector<12x1xf32> -> vector<12x1xf32>
    %c3_35 = arith.constant 3 : index
    %c0_36 = arith.constant 0 : index
    %c0_37 = arith.constant 0 : index
    %31 = vector.load %arg4[%c3_35, %c0_36, %c0_37] : memref<4x32x12xf32, #tpu.memory_space<vmem>>, vector<1x32x12xf32>
    %32 = vector.shape_cast %31 : vector<1x32x12xf32> to vector<32x12xf32>
    %cst_38 = arith.constant dense<0.000000e+00> : vector<32x1xf32>
    %33 = tpu.matmul %32, %30, %cst_38 {dimension_numbers = #tpu.dot_dimension_numbers<[1], [0], [0], [1], [0, 0, 1, 1], [], []>} : vector<32x12xf32>, vector<12x1xf32>, vector<32x1xf32> -> vector<32x1xf32>
    %34 = arith.addf %27, %33 : vector<32x1xf32>
    %c0_39 = arith.constant 0 : index
    %c0_40 = arith.constant 0 : index
    %c0_41 = arith.constant 0 : index
    %35 = vector.load %arg8[%c0_39, %c0_40, %c0_41] : memref<1x32x1xf32, #tpu.memory_space<vmem>>, vector<1x32x1xf32>
    %36 = vector.shape_cast %35 : vector<1x32x1xf32> to vector<32x1xf32>
    %37 = vector.shape_cast %34 : vector<32x1xf32> to vector<1x32x1xf32>
    tpu.vector_store %arg8[%c0_39, %c0_40, %c0_41], %37 {strides = array<i32>} : memref<1x32x1xf32, #tpu.memory_space<vmem>>, vector<1x32x1xf32>,
    %cst_42 = arith.constant dense<0.000000e+00> : vector<32x1xf32>
    %38 = tpu.matmul %2, %34, %cst_42 {dimension_numbers = #tpu.dot_dimension_numbers<[1], [0], [0], [1], [0, 0, 1, 1], [], []>} : vector<32x32xf32>, vector<32x1xf32>, vector<32x1xf32> -> vector<32x1xf32>
    %39 = arith.addf %38, %3 : vector<32x1xf32>
    %c0_43 = arith.constant 0 : index
    %c0_44 = arith.constant 0 : index
    %c0_45 = arith.constant 0 : index
    %40 = vector.load %arg9[%c0_43, %c0_44, %c0_45] : memref<1x32x1xf32, #tpu.memory_space<vmem>>, vector<1x32x1xf32>
    %41 = vector.shape_cast %40 : vector<1x32x1xf32> to vector<32x1xf32>
    %42 = vector.shape_cast %39 : vector<32x1xf32> to vector<1x32x1xf32>
    tpu.vector_store %arg9[%c0_43, %c0_44, %c0_45], %42 {strides = array<i32>} : memref<1x32x1xf32, #tpu.memory_space<vmem>>, vector<1x32x1xf32>,
    return
  }
  func.func @transform_0(%arg0: i32) -> (i32, i32, i32) {
    %c0_i32 = arith.constant 0 : i32
    %c0_i32_0 = arith.constant 0 : i32
    %c0_i32_1 = arith.constant 0 : i32
    return %arg0, %c0_i32, %c0_i32_0 : i32, i32, i32
  }
  func.func @transform_1(%arg0: i32) -> (i32, i32) {
    %c0_i32 = arith.constant 0 : i32
    %c0_i32_0 = arith.constant 0 : i32
    %c0_i32_1 = arith.constant 0 : i32
    return %c0_i32, %c0_i32_0 : i32, i32
  }
  func.func @transform_2(%arg0: i32) -> (i32, i32, i32) {
    %c0_i32 = arith.constant 0 : i32
    %c0_i32_0 = arith.constant 0 : i32
    %c0_i32_1 = arith.constant 0 : i32
    %c0_i32_2 = arith.constant 0 : i32
    return %c0_i32, %c0_i32_0, %c0_i32_1 : i32, i32, i32
  }
  func.func @transform_3(%arg0: i32) -> (i32, i32, i32) {
    %c0_i32 = arith.constant 0 : i32
    %c0_i32_0 = arith.constant 0 : i32
    %c0_i32_1 = arith.constant 0 : i32
    %c0_i32_2 = arith.constant 0 : i32
    return %c0_i32, %c0_i32_0, %c0_i32_1 : i32, i32, i32
  }
  func.func @transform_4(%arg0: i32) -> (i32, i32) {
    %c0_i32 = arith.constant 0 : i32
    %c0_i32_0 = arith.constant 0 : i32
    %c0_i32_1 = arith.constant 0 : i32
    return %c0_i32, %c0_i32_0 : i32, i32
  }
  func.func @transform_5(%arg0: i32) -> (i32, i32) {
    %c0_i32 = arith.constant 0 : i32
    %c0_i32_0 = arith.constant 0 : i32
    %c0_i32_1 = arith.constant 0 : i32
    return %c0_i32, %c0_i32_0 : i32, i32
  }
  func.func @transform_6(%arg0: i32) -> (i32, i32) {
    %c0_i32 = arith.constant 0 : i32
    %c0_i32_0 = arith.constant 0 : i32
    %c0_i32_1 = arith.constant 0 : i32
    return %c0_i32, %c0_i32_0 : i32, i32
  }
  func.func @transform_7(%arg0: i32) -> (i32, i32, i32) {
    %c0_i32 = arith.constant 0 : i32
    %c0_i32_0 = arith.constant 0 : i32
    %c0_i32_1 = arith.constant 0 : i32
    return %arg0, %c0_i32, %c0_i32_0 : i32, i32, i32
  }
  func.func @transform_8(%arg0: i32) -> (i32, i32, i32) {
    %c0_i32 = arith.constant 0 : i32
    %c0_i32_0 = arith.constant 0 : i32
    %c0_i32_1 = arith.constant 0 : i32
    return %arg0, %c0_i32, %c0_i32_0 : i32, i32, i32
  }
}

</mosaic_0001>

<llo_original>
// kernel: tpu_custom_call.1
$region0: #{tpu_custom_call.1}
  #allocation0 [shape = 'u32[]', space=smem, size = 0x4, offset = 0x4, fixed_abs, tag = 'smem constant byte address 0x4 - core index']
  #allocation1 [shape = 'u32[144,128]{1,0:T(1,128)}', space=vmem, size = 0x12000, scoped, tag = 'internal scratch']
  %s0 = inlined_call_operand.vmem [shape: bf16[2,48,16], index: 0, kind: input, shape index: {}]
  %s1 = inlined_call_operand.vmem [shape: bf16[12,48], index: 1, kind: input, shape index: {}]
  %s2 = inlined_call_operand.vmem [shape: f32[4,16,1], index: 2, kind: input, shape index: {}]
  %s3 = inlined_call_operand.vmem [shape: f32[4,32,12], index: 3, kind: input, shape index: {}]
  %s4 = inlined_call_operand.vmem [shape: f32[32,1], index: 4, kind: input, shape index: {}]
  %s5 = inlined_call_operand.vmem [shape: f32[32,32], index: 5, kind: input, shape index: {}]
  %s6 = inlined_call_operand.vmem [shape: f32[32,1], index: 6, kind: input, shape index: {}]
  %s7 = inlined_call_operand.vmem [shape: f32[2,32,1], index: 7, kind: output, shape index: {0}]
  %s8 = inlined_call_operand.vmem [shape: f32[2,32,1], index: 8, kind: output, shape index: {1}]
  %9 = xla_tuple %s7, %s8
  %s10 = sld [smem:[#allocation0]]
  $region69: #{tpu_custom_call.1} parent=0
    _
  %s12 = ssub.s32 1, %s10
  %s13 = scalar_select 0, %s12, %s10
  loop: start=0, step=1, limit=4
  $region2: #{tpu_custom_call.1} parent=0 // loop_pre_header
    _
  $region3: #{tpu_custom_call.1} parent=0 // loop_header
    %s15 = sphi 0, %s19
    %p16 = scmp.ge.s32.totalorder %s15, 4
    %s25 = sphi 0, %s27
    %s28 = sphi 0, %s25
    %s29 = sphi 0, %s28
    %s45 = sphi 0, %s29
    %s49 = sphi 0, %s49
    %s51 = sphi 0, %s49
    %s52 = sphi 0, %s51
    %s66 = sphi 0, %s52
    %s70 = sphi 0, %s70
    %s72 = sphi 0, %s70
    %s73 = sphi 0, %s72
    %s87 = sphi 0, %s73
    %s91 = sphi 0, %s91
    %s93 = sphi 0, %s91
    %s94 = sphi 0, %s93
    %s108 = sphi 0, %s94
    %s112 = sphi 0, %s112
    %s114 = sphi 0, %s112
    %s115 = sphi 0, %s114
    %s129 = sphi 0, %s115
    %s133 = sphi 0, %s133
    %s135 = sphi 0, %s133
    %s136 = sphi 0, %s135
    %s150 = sphi 0, %s136
    %s154 = sphi 0, %s154
    %s156 = sphi 0, %s154
    %s157 = sphi 0, %s156
    %s171 = sphi 0, %s157
    %s177 = sphi 0, %s179
    %s180 = sphi 0, %s177
    %s181 = sphi 0, %s180
    %s197 = sphi 0, %s181
    %s203 = sphi 0, %s205
    %s206 = sphi 0, %s203
    %s207 = sphi 0, %s206
    %s223 = sphi 0, %s207
  $region4: #{tpu_custom_call.1} parent=0 // loop_header_branch
    %18 = sbr.rel (%p16) target = $region8
  $region5: #{tpu_custom_call.1} parent=0 // loop_body
    %s20 = ssub.s32 %s15, 1
    %s21 = ssub.s32 %s15, 2
    %s22 = sadd.s32 %s15, 1
    %s23 = ssub.s32 %s15, %s22
    %p24 = scmp.eq.s32.totalorder %s23, 0
    %s26 = sadd.s32 %s25, 1
    %s27 = scalar_select %p24, %s25, %s26
    %p30 = pneg %p24
    %p31 = scmp.eq.s32.totalorder %s15, 1
    %p32 = por %p30, %p31
    %p33 = scmp.ne.s32.totalorder %s25, %s28
    %p34 = scmp.eq.s32.totalorder %s15, 0
    %p35 = por %p33, %p34
    %p36 = scmp.ne.s32.totalorder %s25, %s28
    %p37 = scmp.eq.s32.totalorder %s20, 1
    %p38 = por %p36, %p37
    %p39 = scmp.ne.s32.totalorder %s28, %s29
    %p40 = scmp.eq.s32.totalorder %s20, 0
    %p41 = por %p39, %p40
    %p42 = scmp.ne.s32.totalorder %s28, %s29
    %p43 = scmp.eq.s32.totalorder %s21, 1
    %p44 = por %p42, %p43
    %p46 = scmp.ne.s32.totalorder %s29, %s45
    %p47 = scmp.eq.s32.totalorder %s21, 0
    %p48 = por %p46, %p47
    %s50 = sadd.s32 %s49, 1
    %p53 = scmp.eq.s32.totalorder %s15, 1
    %p54 = scmp.ne.s32.totalorder %s49, %s51
    %p55 = scmp.eq.s32.totalorder %s15, 0
    %p56 = por %p54, %p55
    %p57 = scmp.ne.s32.totalorder %s49, %s51
    %p58 = scmp.eq.s32.totalorder %s20, 1
    %p59 = por %p57, %p58
    %p60 = scmp.ne.s32.totalorder %s51, %s52
    %p61 = scmp.eq.s32.totalorder %s20, 0
    %p62 = por %p60, %p61
    %p63 = scmp.ne.s32.totalorder %s51, %s52
    %p64 = scmp.eq.s32.totalorder %s21, 1
    %p65 = por %p63, %p64
    %p67 = scmp.ne.s32.totalorder %s52, %s66
    %p68 = scmp.eq.s32.totalorder %s21, 0
    %p69 = por %p67, %p68
    %s71 = sadd.s32 %s70, 1
    %p74 = scmp.eq.s32.totalorder %s15, 1
    %p75 = scmp.ne.s32.totalorder %s70, %s72
    %p76 = scmp.eq.s32.totalorder %s15, 0
    %p77 = por %p75, %p76
    %p78 = scmp.ne.s32.totalorder %s70, %s72
    %p79 = scmp.eq.s32.totalorder %s20, 1
    %p80 = por %p78, %p79
    %p81 = scmp.ne.s32.totalorder %s72, %s73
    %p82 = scmp.eq.s32.totalorder %s20, 0
    %p83 = por %p81, %p82
    %p84 = scmp.ne.s32.totalorder %s72, %s73
    %p85 = scmp.eq.s32.totalorder %s21, 1
    %p86 = por %p84, %p85
    %p88 = scmp.ne.s32.totalorder %s73, %s87
    %p89 = scmp.eq.s32.totalorder %s21, 0
    %p90 = por %p88, %p89
    %s92 = sadd.s32 %s91, 1
    %p95 = scmp.eq.s32.totalorder %s15, 1
    %p96 = scmp.ne.s32.totalorder %s91, %s93
    %p97 = scmp.eq.s32.totalorder %s15, 0
    %p98 = por %p96, %p97
    %p99 = scmp.ne.s32.totalorder %s91, %s93
    %p100 = scmp.eq.s32.totalorder %s20, 1
    %p101 = por %p99, %p100
    %p102 = scmp.ne.s32.totalorder %s93, %s94
    %p103 = scmp.eq.s32.totalorder %s20, 0
    %p104 = por %p102, %p103
    %p105 = scmp.ne.s32.totalorder %s93, %s94
    %p106 = scmp.eq.s32.totalorder %s21, 1
    %p107 = por %p105, %p106
    %p109 = scmp.ne.s32.totalorder %s94, %s108
    %p110 = scmp.eq.s32.totalorder %s21, 0
    %p111 = por %p109, %p110
    %s113 = sadd.s32 %s112, 1
    %p116 = scmp.eq.s32.totalorder %s15, 1
    %p117 = scmp.ne.s32.totalorder %s112, %s114
    %p118 = scmp.eq.s32.totalorder %s15, 0
    %p119 = por %p117, %p118
    %p120 = scmp.ne.s32.totalorder %s112, %s114
    %p121 = scmp.eq.s32.totalorder %s20, 1
    %p122 = por %p120, %p121
    %p123 = scmp.ne.s32.totalorder %s114, %s115
    %p124 = scmp.eq.s32.totalorder %s20, 0
    %p125 = por %p123, %p124
    %p126 = scmp.ne.s32.totalorder %s114, %s115
    %p127 = scmp.eq.s32.totalorder %s21, 1
    %p128 = por %p126, %p127
    %p130 = scmp.ne.s32.totalorder %s115, %s129
    %p131 = scmp.eq.s32.totalorder %s21, 0
    %p132 = por %p130, %p131
    %s134 = sadd.s32 %s133, 1
    %p137 = scmp.eq.s32.totalorder %s15, 1
    %p138 = scmp.ne.s32.totalorder %s133, %s135
    %p139 = scmp.eq.s32.totalorder %s15, 0
    %p140 = por %p138, %p139
    %p141 = scmp.ne.s32.totalorder %s133, %s135
    %p142 = scmp.eq.s32.totalorder %s20, 1
    %p143 = por %p141, %p142
    %p144 = scmp.ne.s32.totalorder %s135, %s136
    %p145 = scmp.eq.s32.totalorder %s20, 0
    %p146 = por %p144, %p145
    %p147 = scmp.ne.s32.totalorder %s135, %s136
    %p148 = scmp.eq.s32.totalorder %s21, 1
    %p149 = por %p147, %p148
    %p151 = scmp.ne.s32.totalorder %s136, %s150
    %p152 = scmp.eq.s32.totalorder %s21, 0
    %p153 = por %p151, %p152
    %s155 = sadd.s32 %s154, 1
    %p158 = scmp.eq.s32.totalorder %s15, 1
    %p159 = scmp.ne.s32.totalorder %s154, %s156
    %p160 = scmp.eq.s32.totalorder %s15, 0
    %p161 = por %p159, %p160
    %p162 = scmp.ne.s32.totalorder %s154, %s156
    %p163 = scmp.eq.s32.totalorder %s20, 1
    %p164 = por %p162, %p163
    %p165 = scmp.ne.s32.totalorder %s156, %s157
    %p166 = scmp.eq.s32.totalorder %s20, 0
    %p167 = por %p165, %p166
    %p168 = scmp.ne.s32.totalorder %s156, %s157
    %p169 = scmp.eq.s32.totalorder %s21, 1
    %p170 = por %p168, %p169
    %p172 = scmp.ne.s32.totalorder %s157, %s171
    %p173 = scmp.eq.s32.totalorder %s21, 0
    %p174 = por %p172, %p173
    %s175 = ssub.s32 %s15, %s22
    %p176 = scmp.eq.s32.totalorder %s175, 0
    %s178 = sadd.s32 %s177, 1
    %s179 = scalar_select %p176, %s177, %s178
    %p182 = pneg %p176
    %p183 = scmp.eq.s32.totalorder %s15, 1
    %p184 = por %p182, %p183
    %p185 = scmp.ne.s32.totalorder %s177, %s180
    %p186 = scmp.eq.s32.totalorder %s15, 0
    %p187 = por %p185, %p186
    %p188 = scmp.ne.s32.totalorder %s177, %s180
    %p189 = scmp.eq.s32.totalorder %s20, 1
    %p190 = por %p188, %p189
    %p191 = scmp.ne.s32.totalorder %s180, %s181
    %p192 = scmp.eq.s32.totalorder %s20, 0
    %p193 = por %p191, %p192
    %p194 = scmp.ne.s32.totalorder %s180, %s181
    %p195 = scmp.eq.s32.totalorder %s21, 1
    %p196 = por %p194, %p195
    %p198 = scmp.ne.s32.totalorder %s181, %s197
    %p199 = scmp.eq.s32.totalorder %s21, 0
    %p200 = por %p198, %p199
    %s201 = ssub.s32 %s15, %s22
    %p202 = scmp.eq.s32.totalorder %s201, 0
    %s204 = sadd.s32 %s203, 1
    %s205 = scalar_select %p202, %s203, %s204
    %p208 = pneg %p202
    %p209 = scmp.eq.s32.totalorder %s15, 1
    %p210 = por %p208, %p209
    %p211 = scmp.ne.s32.totalorder %s203, %s206
    %p212 = scmp.eq.s32.totalorder %s15, 0
    %p213 = por %p211, %p212
    %p214 = scmp.ne.s32.totalorder %s203, %s206
    %p215 = scmp.eq.s32.totalorder %s20, 1
    %p216 = por %p214, %p215
    %p217 = scmp.ne.s32.totalorder %s206, %s207
    %p218 = scmp.eq.s32.totalorder %s20, 0
    %p219 = por %p217, %p218
    %p220 = scmp.ne.s32.totalorder %s206, %s207
    %p221 = scmp.eq.s32.totalorder %s21, 1
    %p222 = por %p220, %p221
    %p224 = scmp.ne.s32.totalorder %s207, %s223
    %p225 = scmp.eq.s32.totalorder %s21, 0
    %p226 = por %p224, %p225
    %p227 = scmp.le.s32.totalorder 1, %s15
    %p228 = scmp.lt.s32.totalorder %s15, 3
    %p229 = pnand %p227, %p228
    %p230 = pneg %p229
    // Predicated region
    $region9: #{tpu_custom_call.1} parent=5 // pred_check
      _
    $region10: #{tpu_custom_call.1} parent=5 // pred_check_branch
      %232 = sbr.rel (%p229) target = $region12
    $region11: #{tpu_custom_call.1} parent=5 // pred_region
      %s233 = ssub.s32 %s15, 1
      // Predicated region
      $region13: #{tpu_custom_call.1} parent=11 // pred_check
        %p234 = pneg %p62
      $region14: #{tpu_custom_call.1} parent=11 // pred_check_branch
        %236 = sbr.rel (%p234) target = $region16
      $region15: #{tpu_custom_call.1} parent=11 // pred_region
        _
      $region16: #{tpu_custom_call.1} parent=11 // pred_fallthru
        _
      // Predicated region
      $region17: #{tpu_custom_call.1} parent=11 // pred_check
        %p237 = pneg %p83
      $region18: #{tpu_custom_call.1} parent=11 // pred_check_branch
        %239 = sbr.rel (%p237) target = $region20
      $region19: #{tpu_custom_call.1} parent=11 // pred_region
        _
      $region20: #{tpu_custom_call.1} parent=11 // pred_fallthru
        _
      // Predicated region
      $region21: #{tpu_custom_call.1} parent=11 // pred_check
        %p240 = pneg %p104
      $region22: #{tpu_custom_call.1} parent=11 // pred_check_branch
        %242 = sbr.rel (%p240) target = $region24
      $region23: #{tpu_custom_call.1} parent=11 // pred_region
        _
      $region24: #{tpu_custom_call.1} parent=11 // pred_fallthru
        _
      // Predicated region
      $region25: #{tpu_custom_call.1} parent=11 // pred_check
        %p243 = pneg %p125
      $region26: #{tpu_custom_call.1} parent=11 // pred_check_branch
        %245 = sbr.rel (%p243) target = $region28
      $region27: #{tpu_custom_call.1} parent=11 // pred_region
        _
      $region28: #{tpu_custom_call.1} parent=11 // pred_fallthru
        _
      // Predicated region
      $region29: #{tpu_custom_call.1} parent=11 // pred_check
        %p246 = pneg %p146
      $region30: #{tpu_custom_call.1} parent=11 // pred_check_branch
        %248 = sbr.rel (%p246) target = $region32
      $region31: #{tpu_custom_call.1} parent=11 // pred_region
        _
      $region32: #{tpu_custom_call.1} parent=11 // pred_fallthru
        _
      // Predicated region
      $region33: #{tpu_custom_call.1} parent=11 // pred_check
        %p249 = pneg %p167
      $region34: #{tpu_custom_call.1} parent=11 // pred_check_branch
        %251 = sbr.rel (%p249) target = $region36
      $region35: #{tpu_custom_call.1} parent=11 // pred_region
        _
      $region36: #{tpu_custom_call.1} parent=11 // pred_fallthru
        _
    $region12: #{tpu_custom_call.1} parent=5 // pred_fallthru
      _
    %p252 = scmp.lt.s32.totalorder %s15, 2
    // Predicated region
    $region37: #{tpu_custom_call.1} parent=5 // pred_check
      %p253 = pneg %p252
    $region38: #{tpu_custom_call.1} parent=5 // pred_check_branch
      %255 = sbr.rel (%p253) target = $region40
    $region39: #{tpu_custom_call.1} parent=5 // pred_region
      // Predicated region
      $region41: #{tpu_custom_call.1} parent=39 // pred_check
        %p256 = pneg %p35
      $region42: #{tpu_custom_call.1} parent=39 // pred_check_branch
        %258 = sbr.rel (%p256) target = $region44
      $region43: #{tpu_custom_call.1} parent=39 // pred_region
        %p259 = scmp.lt.s32.totalorder %s15, 1
        %s260 = scalar_select %p259, %s15, 1
        %s261 = smul.addr %s260, 6
        %s262 = smul.addr %s261, 4
        %s263 = scalar_lea.vmem %s0, %s262
      $region44: #{tpu_custom_call.1} parent=39 // pred_fallthru
        _
    $region40: #{tpu_custom_call.1} parent=5 // pred_fallthru
      _
    %p264 = scmp.le.s32.totalorder 1, %s15
    %p265 = scmp.lt.s32.totalorder %s15, 3
    %p266 = pnand %p264, %p265
    %p267 = pneg %p266
    // Predicated region
    $region45: #{tpu_custom_call.1} parent=5 // pred_check
      _
    $region46: #{tpu_custom_call.1} parent=5 // pred_check_branch
      %269 = sbr.rel (%p266) target = $region48
    $region47: #{tpu_custom_call.1} parent=5 // pred_region
      %s270 = ssub.s32 %s15, 1
      %p271 = scmp.lt.s32.totalorder %s20, 1
      %s272 = scalar_select %p271, %s20, 1
      %s273 = smul.addr %s272, 6
      %s274 = smul.addr %s273, 4
      %s275 = scalar_lea.vmem %s0, %s274
      %p276 = pneg %p41
      %p277 = pneg %p38
      %p278 = pneg %p62
      %p279 = pneg %p59
      %p280 = pneg %p83
      %p281 = pneg %p80
      %p282 = pneg %p104
      %p283 = pneg %p101
      %p284 = pneg %p125
      %p285 = pneg %p122
      %p286 = pneg %p146
      %p287 = pneg %p143
      %p288 = pneg %p167
      %p289 = pneg %p164
      %p290 = pneg %p193
      %p291 = pneg %p190
      %p292 = scmp.lt.s32.totalorder %s20, 1
      %s293 = scalar_select %p292, %s20, 1
      %s294 = smul.addr %s293, 4
      %s295 = smul.addr %s294, 8
      %s296 = scalar_lea.vmem %s7, %s295
      %p297 = pneg %p219
      %p298 = pneg %p216
      %p299 = scmp.lt.s32.totalorder %s20, 1
      %s300 = scalar_select %p299, %s20, 1
      %s301 = smul.addr %s300, 4
      %s302 = smul.addr %s301, 8
      %s303 = scalar_lea.vmem %s8, %s302
      %p304 = scmp.lt.s32.totalorder %s20, 1
      %s305 = scalar_select %p304, %s20, 1
      %s306 = smul.addr %s305, 6
      %s307 = smul.addr %s306, 4
      %s308 = scalar_lea.vmem %s0, %s307
      %p309 = scmp.lt.s32.totalorder %s20, 1
      %s310 = scalar_select %p309, %s20, 1
      %s311 = smul.addr %s310, 4
      %s312 = smul.addr %s311, 8
      %s313 = scalar_lea.vmem %s7, %s312
      %p314 = scmp.lt.s32.totalorder %s20, 1
      %s315 = scalar_select %p314, %s20, 1
      %s316 = smul.addr %s315, 4
      %s317 = smul.addr %s316, 8
      %s318 = scalar_lea.vmem %s8, %s317
      %v320 = vld [vmem:[%s1] sm:$0xf]
      %v321 = vld [vmem:[%s1 + $0x4] sm:$0x3]
      %v322 = vld [vmem:[%s4] sm:$0xff]
      %v323 = vld [vmem:[%s4 + $0x8] sm:$0xff]
      %v324 = vld [vmem:[%s4 + $0x10] sm:$0xff]
      %v325 = vld [vmem:[%s4 + $0x18] sm:$0xff]
      %v326 = vld [vmem:[%s5] sm:$0xff]
      %v327 = vld [vmem:[%s5 + $0x8] sm:$0xff]
      %v328 = vld [vmem:[%s5 + $0x10] sm:$0xff]
      %v329 = vld [vmem:[%s5 + $0x18] sm:$0xff]
      %v330 = vld [vmem:[%s6] sm:$0xff]
      %v331 = vld [vmem:[%s6 + $0x8] sm:$0xff]
      %v332 = vld [vmem:[%s6 + $0x10] sm:$0xff]
      %v333 = vld [vmem:[%s6 + $0x18] sm:$0xff]
      %v334 = vld [vmem:[%s308] sm:$0xf]
      %v335 = vld [vmem:[%s308 + $0x4] sm:$0xf]
      %v336 = vld [vmem:[%s308 + $0x8] sm:$0xf]
      %v337 = vld [vmem:[%s308 + $0xc] sm:$0xf]
      %v338 = vld [vmem:[%s308 + $0x10] sm:$0xf]
      %v339 = vld [vmem:[%s308 + $0x14] sm:$0xf]
      %v342 = vunpack.c.l.b16 %v320
      %v343 = vunpack.c.l.b16 %v321
      %v344 = vpack.c.b16 %v343, %v342
      %v351 = vunpack.c.l.b16 %v334
      %v352 = vunpack.c.l.b16 %v335
      %v353 = vunpack.c.l.b16 %v336
      %v354 = vunpack.c.l.b16 %v337
      %v355 = vunpack.c.l.b16 %v338
      %v356 = vunpack.c.l.b16 %v339
      %v357 = vpack.c.b16 %v352, %v351
      %v358 = vpack.c.b16 %v354, %v353
      %v359 = vpack.c.b16 %v356, %v355
      %vm363 = vcmask 392192
      %v365 = vsel %vm363, %v344, 0
      %367 = vmatprep.subr.bf16.mxu0 0
      %368 = vmatpush1.bf16.msra.mxu0 %v357
      %369 = vmatprep.subr.bf16.mxu0 0
      %370 = vmatpush1.bf16.msra.mxu0 %v358
      %371 = vmatprep.subr.bf16.mxu0 0
      %372 = vmatpush1.bf16.msra.mxu0 %v359
      %373 = vmatprep.subr.bf16.mxu0 0
      %374 = vmatpush1.bf16.msra.mxu0 0
      %375 = vmatprep.subr.bf16.mxu0 0
      %376 = vmatpush1.bf16.msra.mxu0 0
      %377 = vmatprep.subr.bf16.mxu0 0
      %378 = vmatpush1.bf16.msra.mxu0 0
      %379 = vmatprep.subr.bf16.mxu0 0
      %380 = vmatpush1.bf16.msra.mxu0 0
      %381 = vmatprep.subr.bf16.mxu0 0
      %382 = vmatpush1.bf16.msra.mxu0 0
      %383 = vmatprep.subr.bf16.mxu0 0
      %384 = vmatpush1.bf16.msra.mxu0 0
      %385 = vmatprep.subr.bf16.mxu0 0
      %386 = vmatpush1.bf16.msra.mxu0 0
      %387 = vmatprep.subr.bf16.mxu0 0
      %388 = vmatpush1.bf16.msra.mxu0 0
      %389 = vmatprep.subr.bf16.mxu0 0
      %390 = vmatpush1.bf16.msra.mxu0 0
      %391 = vmatprep.subr.bf16.mxu0 0
      %392 = vmatpush1.bf16.msra.mxu0 0
      %393 = vmatprep.subr.bf16.mxu0 0
      %394 = vmatpush1.bf16.msra.mxu0 0
      %395 = vmatprep.subr.bf16.mxu0 0
      %396 = vmatpush1.bf16.msra.mxu0 0
      %397 = vmatprep.subr.bf16.mxu0 0
      %398 = vmatpush1.bf16.msra.mxu0 0
      %399 = vmatprep.mubr.bf16.mxu0 0
      %400 = vmatmul.mubr.bf16.gmra.mrb[0].mxu0 %v365
      %v401 = vpop.f32.mrb[0].mxu0
      %v402 = vadd.f32 0.0, %v401
      %v403 = vpop.f32.mrb[0].mxu0
      %v404 = vpop.f32.mrb[0].mxu0
      %v405 = vadd.f32 0.0, %v404
      %v406 = vpop.f32.mrb[0].mxu0
      %407 = vdwg.mxu0
      %v408 = vld [vmem:[%s2] sm:$0xff]
      %v409 = vld [vmem:[%s2 + $0x8] sm:$0xff]
      %vm410 = vcmask 130048
      %v412 = vsel %vm410, %v402, 0
      %v415 = vsel %vm410, %v405, 0
      %417 = vmatprep.subr.mxu0 0.0
      %418 = vmatpush1.msra.mxu0 %v408
      %419 = vmatprep.subr.mxu0 0.0
      %420 = vmatpush1.msra.mxu0 %v409
      %421 = vmatprep.subr.mxu0 0.0
      %422 = vmatpush1.msra.mxu0 0.0
      %423 = vmatprep.subr.mxu0 0.0
      %424 = vmatpush1.msra.mxu0 0.0
      %425 = vmatprep.subr.mxu0 0.0
      %426 = vmatpush1.msra.mxu0 0.0
      %427 = vmatprep.subr.mxu0 0.0
      %428 = vmatpush1.msra.mxu0 0.0
      %429 = vmatprep.subr.mxu0 0.0
      %430 = vmatpush1.msra.mxu0 0.0
      %431 = vmatprep.subr.mxu0 0.0
      %432 = vmatpush1.msra.mxu0 0.0
      %433 = vmatprep.subr.mxu0 0.0
      %434 = vmatpush1.msra.mxu0 0.0
      %435 = vmatprep.subr.mxu0 0.0
      %436 = vmatpush1.msra.mxu0 0.0
      %437 = vmatprep.subr.mxu0 0.0
      %438 = vmatpush1.msra.mxu0 0.0
      %439 = vmatprep.subr.mxu0 0.0
      %440 = vmatpush1.msra.mxu0 0.0
      %441 = vmatprep.subr.mxu0 0.0
      %442 = vmatpush1.msra.mxu0 0.0
      %443 = vmatprep.subr.mxu0 0.0
      %444 = vmatpush1.msra.mxu0 0.0
      %445 = vmatprep.subr.mxu0 0.0
      %446 = vmatpush1.msra.mxu0 0.0
      %447 = vmatprep.subr.mxu0 0.0
      %448 = vmatpush1.msra.mxu0 0.0
      %449 = vmatprep.subr.mxu0 0.0
      %450 = vmatpush1.msra.mxu0 0.0
      %451 = vmatprep.subr.mxu0 0.0
      %452 = vmatpush1.msra.mxu0 0.0
      %453 = vmatprep.subr.mxu0 0.0
      %454 = vmatpush1.msra.mxu0 0.0
      %455 = vmatprep.subr.mxu0 0.0
      %456 = vmatpush1.msra.mxu0 0.0
      %457 = vmatprep.subr.mxu0 0.0
      %458 = vmatpush1.msra.mxu0 0.0
      %459 = vmatprep.subr.mxu0 0.0
      %460 = vmatpush1.msra.mxu0 0.0
      %461 = vmatprep.subr.mxu0 0.0
      %462 = vmatpush1.msra.mxu0 0.0
      %463 = vmatprep.subr.mxu0 0.0
      %464 = vmatpush1.msra.mxu0 0.0
      %465 = vmatprep.subr.mxu0 0.0
      %466 = vmatpush1.msra.mxu0 0.0
      %467 = vmatprep.subr.mxu0 0.0
      %468 = vmatpush1.msra.mxu0 0.0
      %469 = vmatprep.subr.mxu0 0.0
      %470 = vmatpush1.msra.mxu0 0.0
      %471 = vmatprep.subr.mxu0 0.0
      %472 = vmatpush1.msra.mxu0 0.0
      %473 = vmatprep.subr.mxu0 0.0
      %474 = vmatpush1.msra.mxu0 0.0
      %475 = vmatprep.subr.mxu0 0.0
      %476 = vmatpush1.msra.mxu0 0.0
      %477 = vmatprep.subr.mxu0 0.0
      %478 = vmatpush1.msra.mxu0 0.0
      %479 = vmatprep.subr.mxu0 0.0
      %480 = vmatpush1.msra.mxu0 0.0
      %481 = vmatprep.mubr.f32.mxu0 0.0
      %482 = vmatmul.mubr.f32.gmra.mrb[0].mxu0 %v412
      %v483 = vpop.f32.mrb[0].mxu0
      %v484 = vadd.f32 0.0, %v483
      %v485 = vpop.f32.mrb[0].mxu0
      %486 = vmatprep.mubr.f32.mxu0 0.0
      %487 = vmatmul.mubr.f32.gmra.mrb[0].mxu0 %v415
      %v488 = vpop.f32.mrb[0].mxu0
      %v489 = vadd.f32 0.0, %v488
      %v490 = vpop.f32.mrb[0].mxu0
      %491 = vdwg.mxu0
      %v492 = vld [vmem:[%s3] sm:$0xff]
      %v493 = vld [vmem:[%s3 + $0x8] sm:$0xff]
      %v494 = vld [vmem:[%s3 + $0x10] sm:$0xff]
      %v495 = vld [vmem:[%s3 + $0x18] sm:$0xff]
      %vm496 = vcmask 97280
      %v498 = vsel %vm496, %v492, 0
      %v501 = vsel %vm496, %v493, 0
      %v504 = vsel %vm496, %v494, 0
      %v507 = vsel %vm496, %v495, 0
      %vm509 = vcmask 1043456
      %v511 = vsel %vm509, %v489, 0
      %513 = vmatprep.subr.mxu0 0.0
      %514 = vmatpush1.msra.mxu0 %v484
      %515 = vmatprep.subr.mxu0 0.0
      %516 = vmatpush1.msra.mxu0 %v511
      %517 = vmatprep.subr.mxu0 0.0
      %518 = vmatpush1.msra.mxu0 0.0
      %519 = vmatprep.subr.mxu0 0.0
      %520 = vmatpush1.msra.mxu0 0.0
      %521 = vmatprep.subr.mxu0 0.0
      %522 = vmatpush1.msra.mxu0 0.0
      %523 = vmatprep.subr.mxu0 0.0
      %524 = vmatpush1.msra.mxu0 0.0
      %525 = vmatprep.subr.mxu0 0.0
      %526 = vmatpush1.msra.mxu0 0.0
      %527 = vmatprep.subr.mxu0 0.0
      %528 = vmatpush1.msra.mxu0 0.0
      %529 = vmatprep.subr.mxu0 0.0
      %530 = vmatpush1.msra.mxu0 0.0
      %531 = vmatprep.subr.mxu0 0.0
      %532 = vmatpush1.msra.mxu0 0.0
      %533 = vmatprep.subr.mxu0 0.0
      %534 = vmatpush1.msra.mxu0 0.0
      %535 = vmatprep.subr.mxu0 0.0
      %536 = vmatpush1.msra.mxu0 0.0
      %537 = vmatprep.subr.mxu0 0.0
      %538 = vmatpush1.msra.mxu0 0.0
      %539 = vmatprep.subr.mxu0 0.0
      %540 = vmatpush1.msra.mxu0 0.0
      %541 = vmatprep.subr.mxu0 0.0
      %542 = vmatpush1.msra.mxu0 0.0
      %543 = vmatprep.subr.mxu0 0.0
      %544 = vmatpush1.msra.mxu0 0.0
      %545 = vmatprep.subr.mxu0 0.0
      %546 = vmatpush1.msra.mxu0 0.0
      %547 = vmatprep.subr.mxu0 0.0
      %548 = vmatpush1.msra.mxu0 0.0
      %549 = vmatprep.subr.mxu0 0.0
      %550 = vmatpush1.msra.mxu0 0.0
      %551 = vmatprep.subr.mxu0 0.0
      %552 = vmatpush1.msra.mxu0 0.0
      %553 = vmatprep.subr.mxu0 0.0
      %554 = vmatpush1.msra.mxu0 0.0
      %555 = vmatprep.subr.mxu0 0.0
      %556 = vmatpush1.msra.mxu0 0.0
      %557 = vmatprep.subr.mxu0 0.0
      %558 = vmatpush1.msra.mxu0 0.0
      %559 = vmatprep.subr.mxu0 0.0
      %560 = vmatpush1.msra.mxu0 0.0
      %561 = vmatprep.subr.mxu0 0.0
      %562 = vmatpush1.msra.mxu0 0.0
      %563 = vmatprep.subr.mxu0 0.0
      %564 = vmatpush1.msra.mxu0 0.0
      %565 = vmatprep.subr.mxu0 0.0
      %566 = vmatpush1.msra.mxu0 0.0
      %567 = vmatprep.subr.mxu0 0.0
      %568 = vmatpush1.msra.mxu0 0.0
      %569 = vmatprep.subr.mxu0 0.0
      %570 = vmatpush1.msra.mxu0 0.0
      %571 = vmatprep.subr.mxu0 0.0
      %572 = vmatpush1.msra.mxu0 0.0
      %573 = vmatprep.subr.mxu0 0.0
      %574 = vmatpush1.msra.mxu0 0.0
      %575 = vmatprep.subr.mxu0 0.0
      %576 = vmatpush1.msra.mxu0 0.0
      %577 = vmatprep.mubr.f32.mxu0 0.0
      %578 = vmatmul.mubr.f32.gmra.mrb[0].mxu0 %v498
      %v579 = vpop.f32.mrb[0].mxu0
      %v580 = vadd.f32 0.0, %v579
      %v581 = vpop.f32.mrb[0].mxu0
      %582 = vmatprep.mubr.f32.mxu0 0.0
      %583 = vmatmul.mubr.f32.gmra.mrb[0].mxu0 %v501
      %v584 = vpop.f32.mrb[0].mxu0
      %v585 = vadd.f32 0.0, %v584
      %v586 = vpop.f32.mrb[0].mxu0
      %587 = vmatprep.mubr.f32.mxu0 0.0
      %588 = vmatmul.mubr.f32.gmra.mrb[0].mxu0 %v504
      %v589 = vpop.f32.mrb[0].mxu0
      %v590 = vadd.f32 0.0, %v589
      %v591 = vpop.f32.mrb[0].mxu0
      %592 = vmatprep.mubr.f32.mxu0 0.0
      %593 = vmatmul.mubr.f32.gmra.mrb[0].mxu0 %v507
      %v594 = vpop.f32.mrb[0].mxu0
      %v595 = vadd.f32 0.0, %v594
      %v596 = vpop.f32.mrb[0].mxu0
      %597 = vdwg.mxu0
      %v598 = vadd.f32 %v322, %v580
      %v599 = vadd.f32 %v323, %v585
      %v600 = vadd.f32 %v324, %v590
      %v601 = vadd.f32 %v325, %v595
      %s602 = scalar_lea.vmem %s2, 16
      %v603 = vld [vmem:[%s602] sm:$0xff]
      %v604 = vld [vmem:[%s602 + $0x8] sm:$0xff]
      %605 = vmatprep.subr.mxu0 0.0
      %606 = vmatpush1.msra.mxu0 %v603
      %607 = vmatprep.subr.mxu0 0.0
      %608 = vmatpush1.msra.mxu0 %v604
      %609 = vmatprep.subr.mxu0 0.0
      %610 = vmatpush1.msra.mxu0 0.0
      %611 = vmatprep.subr.mxu0 0.0
      %612 = vmatpush1.msra.mxu0 0.0
      %613 = vmatprep.subr.mxu0 0.0
      %614 = vmatpush1.msra.mxu0 0.0
      %615 = vmatprep.subr.mxu0 0.0
      %616 = vmatpush1.msra.mxu0 0.0
      %617 = vmatprep.subr.mxu0 0.0
      %618 = vmatpush1.msra.mxu0 0.0
      %619 = vmatprep.subr.mxu0 0.0
      %620 = vmatpush1.msra.mxu0 0.0
      %621 = vmatprep.subr.mxu0 0.0
      %622 = vmatpush1.msra.mxu0 0.0
      %623 = vmatprep.subr.mxu0 0.0
      %624 = vmatpush1.msra.mxu0 0.0
      %625 = vmatprep.subr.mxu0 0.0
      %626 = vmatpush1.msra.mxu0 0.0
      %627 = vmatprep.subr.mxu0 0.0
      %628 = vmatpush1.msra.mxu0 0.0
      %629 = vmatprep.subr.mxu0 0.0
      %630 = vmatpush1.msra.mxu0 0.0
      %631 = vmatprep.subr.mxu0 0.0
      %632 = vmatpush1.msra.mxu0 0.0
      %633 = vmatprep.subr.mxu0 0.0
      %634 = vmatpush1.msra.mxu0 0.0
      %635 = vmatprep.subr.mxu0 0.0
      %636 = vmatpush1.msra.mxu0 0.0
      %637 = vmatprep.subr.mxu0 0.0
      %638 = vmatpush1.msra.mxu0 0.0
      %639 = vmatprep.subr.mxu0 0.0
      %640 = vmatpush1.msra.mxu0 0.0
      %641 = vmatprep.subr.mxu0 0.0
      %642 = vmatpush1.msra.mxu0 0.0
      %643 = vmatprep.subr.mxu0 0.0
      %644 = vmatpush1.msra.mxu0 0.0
      %645 = vmatprep.subr.mxu0 0.0
      %646 = vmatpush1.msra.mxu0 0.0
      %647 = vmatprep.subr.mxu0 0.0
      %648 = vmatpush1.msra.mxu0 0.0
      %649 = vmatprep.subr.mxu0 0.0
      %650 = vmatpush1.msra.mxu0 0.0
      %651 = vmatprep.subr.mxu0 0.0
      %652 = vmatpush1.msra.mxu0 0.0
      %653 = vmatprep.subr.mxu0 0.0
      %654 = vmatpush1.msra.mxu0 0.0
      %655 = vmatprep.subr.mxu0 0.0
      %656 = vmatpush1.msra.mxu0 0.0
      %657 = vmatprep.subr.mxu0 0.0
      %658 = vmatpush1.msra.mxu0 0.0
      %659 = vmatprep.subr.mxu0 0.0
      %660 = vmatpush1.msra.mxu0 0.0
      %661 = vmatprep.subr.mxu0 0.0
      %662 = vmatpush1.msra.mxu0 0.0
      %663 = vmatprep.subr.mxu0 0.0
      %664 = vmatpush1.msra.mxu0 0.0
      %665 = vmatprep.subr.mxu0 0.0
      %666 = vmatpush1.msra.mxu0 0.0
      %667 = vmatprep.subr.mxu0 0.0
      %668 = vmatpush1.msra.mxu0 0.0
      %669 = vmatprep.mubr.f32.mxu0 0.0
      %670 = vmatmul.mubr.f32.gmra.mrb[0].mxu0 %v412
      %v671 = vpop.f32.mrb[0].mxu0
      %v672 = vadd.f32 0.0, %v671
      %v673 = vpop.f32.mrb[0].mxu0
      %674 = vmatprep.mubr.f32.mxu0 0.0
      %675 = vmatmul.mubr.f32.gmra.mrb[0].mxu0 %v415
      %v676 = vpop.f32.mrb[0].mxu0
      %v677 = vadd.f32 0.0, %v676
      %v678 = vpop.f32.mrb[0].mxu0
      %679 = vdwg.mxu0
      %s680 = scalar_lea.vmem %s3, 32
      %v681 = vld [vmem:[%s680] sm:$0xff]
      %v682 = vld [vmem:[%s680 + $0x8] sm:$0xff]
      %v683 = vld [vmem:[%s680 + $0x10] sm:$0xff]
      %v684 = vld [vmem:[%s680 + $0x18] sm:$0xff]
      %v686 = vsel %vm496, %v681, 0
      %v689 = vsel %vm496, %v682, 0
      %v692 = vsel %vm496, %v683, 0
      %v695 = vsel %vm496, %v684, 0
      %v698 = vsel %vm509, %v677, 0
      %700 = vmatprep.subr.mxu0 0.0
      %701 = vmatpush1.msra.mxu0 %v672
      %702 = vmatprep.subr.mxu0 0.0
      %703 = vmatpush1.msra.mxu0 %v698
      %704 = vmatprep.subr.mxu0 0.0
      %705 = vmatpush1.msra.mxu0 0.0
      %706 = vmatprep.subr.mxu0 0.0
      %707 = vmatpush1.msra.mxu0 0.0
      %708 = vmatprep.subr.mxu0 0.0
      %709 = vmatpush1.msra.mxu0 0.0
      %710 = vmatprep.subr.mxu0 0.0
      %711 = vmatpush1.msra.mxu0 0.0
      %712 = vmatprep.subr.mxu0 0.0
      %713 = vmatpush1.msra.mxu0 0.0
      %714 = vmatprep.subr.mxu0 0.0
      %715 = vmatpush1.msra.mxu0 0.0
      %716 = vmatprep.subr.mxu0 0.0
      %717 = vmatpush1.msra.mxu0 0.0
      %718 = vmatprep.subr.mxu0 0.0
      %719 = vmatpush1.msra.mxu0 0.0
      %720 = vmatprep.subr.mxu0 0.0
      %721 = vmatpush1.msra.mxu0 0.0
      %722 = vmatprep.subr.mxu0 0.0
      %723 = vmatpush1.msra.mxu0 0.0
      %724 = vmatprep.subr.mxu0 0.0
      %725 = vmatpush1.msra.mxu0 0.0
      %726 = vmatprep.subr.mxu0 0.0
      %727 = vmatpush1.msra.mxu0 0.0
      %728 = vmatprep.subr.mxu0 0.0
      %729 = vmatpush1.msra.mxu0 0.0
      %730 = vmatprep.subr.mxu0 0.0
      %731 = vmatpush1.msra.mxu0 0.0
      %732 = vmatprep.subr.mxu0 0.0
      %733 = vmatpush1.msra.mxu0 0.0
      %734 = vmatprep.subr.mxu0 0.0
      %735 = vmatpush1.msra.mxu0 0.0
      %736 = vmatprep.subr.mxu0 0.0
      %737 = vmatpush1.msra.mxu0 0.0
      %738 = vmatprep.subr.mxu0 0.0
      %739 = vmatpush1.msra.mxu0 0.0
      %740 = vmatprep.subr.mxu0 0.0
      %741 = vmatpush1.msra.mxu0 0.0
      %742 = vmatprep.subr.mxu0 0.0
      %743 = vmatpush1.msra.mxu0 0.0
      %744 = vmatprep.subr.mxu0 0.0
      %745 = vmatpush1.msra.mxu0 0.0
      %746 = vmatprep.subr.mxu0 0.0
      %747 = vmatpush1.msra.mxu0 0.0
      %748 = vmatprep.subr.mxu0 0.0
      %749 = vmatpush1.msra.mxu0 0.0
      %750 = vmatprep.subr.mxu0 0.0
      %751 = vmatpush1.msra.mxu0 0.0
      %752 = vmatprep.subr.mxu0 0.0
      %753 = vmatpush1.msra.mxu0 0.0
      %754 = vmatprep.subr.mxu0 0.0
      %755 = vmatpush1.msra.mxu0 0.0
      %756 = vmatprep.subr.mxu0 0.0
      %757 = vmatpush1.msra.mxu0 0.0
      %758 = vmatprep.subr.mxu0 0.0
      %759 = vmatpush1.msra.mxu0 0.0
      %760 = vmatprep.subr.mxu0 0.0
      %761 = vmatpush1.msra.mxu0 0.0
      %762 = vmatprep.subr.mxu0 0.0
      %763 = vmatpush1.msra.mxu0 0.0
      %764 = vmatprep.mubr.f32.mxu0 0.0
      %765 = vmatmul.mubr.f32.gmra.mrb[0].mxu0 %v686
      %v766 = vpop.f32.mrb[0].mxu0
      %v767 = vadd.f32 0.0, %v766
      %v768 = vpop.f32.mrb[0].mxu0
      %769 = vmatprep.mubr.f32.mxu0 0.0
      %770 = vmatmul.mubr.f32.gmra.mrb[0].mxu0 %v689
      %v771 = vpop.f32.mrb[0].mxu0
      %v772 = vadd.f32 0.0, %v771
      %v773 = vpop.f32.mrb[0].mxu0
      %774 = vmatprep.mubr.f32.mxu0 0.0
      %775 = vmatmul.mubr.f32.gmra.mrb[0].mxu0 %v692
      %v776 = vpop.f32.mrb[0].mxu0
      %v777 = vadd.f32 0.0, %v776
      %v778 = vpop.f32.mrb[0].mxu0
      %779 = vmatprep.mubr.f32.mxu0 0.0
      %780 = vmatmul.mubr.f32.gmra.mrb[0].mxu0 %v695
      %v781 = vpop.f32.mrb[0].mxu0
      %v782 = vadd.f32 0.0, %v781
      %v783 = vpop.f32.mrb[0].mxu0
      %784 = vdwg.mxu0
      %v785 = vadd.f32 %v598, %v767
      %v786 = vadd.f32 %v599, %v772
      %v787 = vadd.f32 %v600, %v777
      %v788 = vadd.f32 %v601, %v782
      %s789 = scalar_lea.vmem %s2, 32
      %v790 = vld [vmem:[%s789] sm:$0xff]
      %v791 = vld [vmem:[%s789 + $0x8] sm:$0xff]
      %792 = vmatprep.subr.mxu0 0.0
      %793 = vmatpush1.msra.mxu0 %v790
      %794 = vmatprep.subr.mxu0 0.0
      %795 = vmatpush1.msra.mxu0 %v791
      %796 = vmatprep.subr.mxu0 0.0
      %797 = vmatpush1.msra.mxu0 0.0
      %798 = vmatprep.subr.mxu0 0.0
      %799 = vmatpush1.msra.mxu0 0.0
      %800 = vmatprep.subr.mxu0 0.0
      %801 = vmatpush1.msra.mxu0 0.0
      %802 = vmatprep.subr.mxu0 0.0
      %803 = vmatpush1.msra.mxu0 0.0
      %804 = vmatprep.subr.mxu0 0.0
      %805 = vmatpush1.msra.mxu0 0.0
      %806 = vmatprep.subr.mxu0 0.0
      %807 = vmatpush1.msra.mxu0 0.0
      %808 = vmatprep.subr.mxu0 0.0
      %809 = vmatpush1.msra.mxu0 0.0
      %810 = vmatprep.subr.mxu0 0.0
      %811 = vmatpush1.msra.mxu0 0.0
      %812 = vmatprep.subr.mxu0 0.0
      %813 = vmatpush1.msra.mxu0 0.0
      %814 = vmatprep.subr.mxu0 0.0
      %815 = vmatpush1.msra.mxu0 0.0
      %816 = vmatprep.subr.mxu0 0.0
      %817 = vmatpush1.msra.mxu0 0.0
      %818 = vmatprep.subr.mxu0 0.0
      %819 = vmatpush1.msra.mxu0 0.0
      %820 = vmatprep.subr.mxu0 0.0
      %821 = vmatpush1.msra.mxu0 0.0
      %822 = vmatprep.subr.mxu0 0.0
      %823 = vmatpush1.msra.mxu0 0.0
      %824 = vmatprep.subr.mxu0 0.0
      %825 = vmatpush1.msra.mxu0 0.0
      %826 = vmatprep.subr.mxu0 0.0
      %827 = vmatpush1.msra.mxu0 0.0
      %828 = vmatprep.subr.mxu0 0.0
      %829 = vmatpush1.msra.mxu0 0.0
      %830 = vmatprep.subr.mxu0 0.0
      %831 = vmatpush1.msra.mxu0 0.0
      %832 = vmatprep.subr.mxu0 0.0
      %833 = vmatpush1.msra.mxu0 0.0
      %834 = vmatprep.subr.mxu0 0.0
      %835 = vmatpush1.msra.mxu0 0.0
      %836 = vmatprep.subr.mxu0 0.0
      %837 = vmatpush1.msra.mxu0 0.0
      %838 = vmatprep.subr.mxu0 0.0
      %839 = vmatpush1.msra.mxu0 0.0
      %840 = vmatprep.subr.mxu0 0.0
      %841 = vmatpush1.msra.mxu0 0.0
      %842 = vmatprep.subr.mxu0 0.0
      %843 = vmatpush1.msra.mxu0 0.0
      %844 = vmatprep.subr.mxu0 0.0
      %845 = vmatpush1.msra.mxu0 0.0
      %846 = vmatprep.subr.mxu0 0.0
      %847 = vmatpush1.msra.mxu0 0.0
      %848 = vmatprep.subr.mxu0 0.0
      %849 = vmatpush1.msra.mxu0 0.0
      %850 = vmatprep.subr.mxu0 0.0
      %851 = vmatpush1.msra.mxu0 0.0
      %852 = vmatprep.subr.mxu0 0.0
      %853 = vmatpush1.msra.mxu0 0.0
      %854 = vmatprep.subr.mxu0 0.0
      %855 = vmatpush1.msra.mxu0 0.0
      %856 = vmatprep.mubr.f32.mxu0 0.0
      %857 = vmatmul.mubr.f32.gmra.mrb[0].mxu0 %v412
      %v858 = vpop.f32.mrb[0].mxu0
      %v859 = vadd.f32 0.0, %v858
      %v860 = vpop.f32.mrb[0].mxu0
      %861 = vmatprep.mubr.f32.mxu0 0.0
      %862 = vmatmul.mubr.f32.gmra.mrb[0].mxu0 %v415
      %v863 = vpop.f32.mrb[0].mxu0
      %v864 = vadd.f32 0.0, %v863
      %v865 = vpop.f32.mrb[0].mxu0
      %866 = vdwg.mxu0
      %s867 = scalar_lea.vmem %s3, 64
      %v868 = vld [vmem:[%s867] sm:$0xff]
      %v869 = vld [vmem:[%s867 + $0x8] sm:$0xff]
      %v870 = vld [vmem:[%s867 + $0x10] sm:$0xff]
      %v871 = vld [vmem:[%s867 + $0x18] sm:$0xff]
      %v873 = vsel %vm496, %v868, 0
      %v876 = vsel %vm496, %v869, 0
      %v879 = vsel %vm496, %v870, 0
      %v882 = vsel %vm496, %v871, 0
      %v885 = vsel %vm509, %v864, 0
      %887 = vmatprep.subr.mxu0 0.0
      %888 = vmatpush1.msra.mxu0 %v859
      %889 = vmatprep.subr.mxu0 0.0
      %890 = vmatpush1.msra.mxu0 %v885
      %891 = vmatprep.subr.mxu0 0.0
      %892 = vmatpush1.msra.mxu0 0.0
      %893 = vmatprep.subr.mxu0 0.0
      %894 = vmatpush1.msra.mxu0 0.0
      %895 = vmatprep.subr.mxu0 0.0
      %896 = vmatpush1.msra.mxu0 0.0
      %897 = vmatprep.subr.mxu0 0.0
      %898 = vmatpush1.msra.mxu0 0.0
      %899 = vmatprep.subr.mxu0 0.0
      %900 = vmatpush1.msra.mxu0 0.0
      %901 = vmatprep.subr.mxu0 0.0
      %902 = vmatpush1.msra.mxu0 0.0
      %903 = vmatprep.subr.mxu0 0.0
      %904 = vmatpush1.msra.mxu0 0.0
      %905 = vmatprep.subr.mxu0 0.0
      %906 = vmatpush1.msra.mxu0 0.0
      %907 = vmatprep.subr.mxu0 0.0
      %908 = vmatpush1.msra.mxu0 0.0
      %909 = vmatprep.subr.mxu0 0.0
      %910 = vmatpush1.msra.mxu0 0.0
      %911 = vmatprep.subr.mxu0 0.0
      %912 = vmatpush1.msra.mxu0 0.0
      %913 = vmatprep.subr.mxu0 0.0
      %914 = vmatpush1.msra.mxu0 0.0
      %915 = vmatprep.subr.mxu0 0.0
      %916 = vmatpush1.msra.mxu0 0.0
      %917 = vmatprep.subr.mxu0 0.0
      %918 = vmatpush1.msra.mxu0 0.0
      %919 = vmatprep.subr.mxu0 0.0
      %920 = vmatpush1.msra.mxu0 0.0
      %921 = vmatprep.subr.mxu0 0.0
      %922 = vmatpush1.msra.mxu0 0.0
      %923 = vmatprep.subr.mxu0 0.0
      %924 = vmatpush1.msra.mxu0 0.0
      %925 = vmatprep.subr.mxu0 0.0
      %926 = vmatpush1.msra.mxu0 0.0
      %927 = vmatprep.subr.mxu0 0.0
      %928 = vmatpush1.msra.mxu0 0.0
      %929 = vmatprep.subr.mxu0 0.0
      %930 = vmatpush1.msra.mxu0 0.0
      %931 = vmatprep.subr.mxu0 0.0
      %932 = vmatpush1.msra.mxu0 0.0
      %933 = vmatprep.subr.mxu0 0.0
      %934 = vmatpush1.msra.mxu0 0.0
      %935 = vmatprep.subr.mxu0 0.0
      %936 = vmatpush1.msra.mxu0 0.0
      %937 = vmatprep.subr.mxu0 0.0
      %938 = vmatpush1.msra.mxu0 0.0
      %939 = vmatprep.subr.mxu0 0.0
      %940 = vmatpush1.msra.mxu0 0.0
      %941 = vmatprep.subr.mxu0 0.0
      %942 = vmatpush1.msra.mxu0 0.0
      %943 = vmatprep.subr.mxu0 0.0
      %944 = vmatpush1.msra.mxu0 0.0
      %945 = vmatprep.subr.mxu0 0.0
      %946 = vmatpush1.msra.mxu0 0.0
      %947 = vmatprep.subr.mxu0 0.0
      %948 = vmatpush1.msra.mxu0 0.0
      %949 = vmatprep.subr.mxu0 0.0
      %950 = vmatpush1.msra.mxu0 0.0
      %951 = vmatprep.mubr.f32.mxu0 0.0
      %952 = vmatmul.mubr.f32.gmra.mrb[0].mxu0 %v873
      %v953 = vpop.f32.mrb[0].mxu0
      %v954 = vadd.f32 0.0, %v953
      %v955 = vpop.f32.mrb[0].mxu0
      %956 = vmatprep.mubr.f32.mxu0 0.0
      %957 = vmatmul.mubr.f32.gmra.mrb[0].mxu0 %v876
      %v958 = vpop.f32.mrb[0].mxu0
      %v959 = vadd.f32 0.0, %v958
      %v960 = vpop.f32.mrb[0].mxu0
      %961 = vmatprep.mubr.f32.mxu0 0.0
      %962 = vmatmul.mubr.f32.gmra.mrb[0].mxu0 %v879
      %v963 = vpop.f32.mrb[0].mxu0
      %v964 = vadd.f32 0.0, %v963
      %v965 = vpop.f32.mrb[0].mxu0
      %966 = vmatprep.mubr.f32.mxu0 0.0
      %967 = vmatmul.mubr.f32.gmra.mrb[0].mxu0 %v882
      %v968 = vpop.f32.mrb[0].mxu0
      %v969 = vadd.f32 0.0, %v968
      %v970 = vpop.f32.mrb[0].mxu0
      %971 = vdwg.mxu0
      %v972 = vadd.f32 %v785, %v954
      %v973 = vadd.f32 %v786, %v959
      %v974 = vadd.f32 %v787, %v964
      %v975 = vadd.f32 %v788, %v969
      %s976 = scalar_lea.vmem %s2, 48
      %v977 = vld [vmem:[%s976] sm:$0xff]
      %v978 = vld [vmem:[%s976 + $0x8] sm:$0xff]
      %979 = vmatprep.subr.mxu0 0.0
      %980 = vmatpush1.msra.mxu0 %v977
      %981 = vmatprep.subr.mxu0 0.0
      %982 = vmatpush1.msra.mxu0 %v978
      %983 = vmatprep.subr.mxu0 0.0
      %984 = vmatpush1.msra.mxu0 0.0
      %985 = vmatprep.subr.mxu0 0.0
      %986 = vmatpush1.msra.mxu0 0.0
      %987 = vmatprep.subr.mxu0 0.0
      %988 = vmatpush1.msra.mxu0 0.0
      %989 = vmatprep.subr.mxu0 0.0
      %990 = vmatpush1.msra.mxu0 0.0
      %991 = vmatprep.subr.mxu0 0.0
      %992 = vmatpush1.msra.mxu0 0.0
      %993 = vmatprep.subr.mxu0 0.0
      %994 = vmatpush1.msra.mxu0 0.0
      %995 = vmatprep.subr.mxu0 0.0
      %996 = vmatpush1.msra.mxu0 0.0
      %997 = vmatprep.subr.mxu0 0.0
      %998 = vmatpush1.msra.mxu0 0.0
      %999 = vmatprep.subr.mxu0 0.0
      %1000 = vmatpush1.msra.mxu0 0.0
      %1001 = vmatprep.subr.mxu0 0.0
      %1002 = vmatpush1.msra.mxu0 0.0
      %1003 = vmatprep.subr.mxu0 0.0
      %1004 = vmatpush1.msra.mxu0 0.0
      %1005 = vmatprep.subr.mxu0 0.0
      %1006 = vmatpush1.msra.mxu0 0.0
      %1007 = vmatprep.subr.mxu0 0.0
      %1008 = vmatpush1.msra.mxu0 0.0
      %1009 = vmatprep.subr.mxu0 0.0
      %1010 = vmatpush1.msra.mxu0 0.0
      %1011 = vmatprep.subr.mxu0 0.0
      %1012 = vmatpush1.msra.mxu0 0.0
      %1013 = vmatprep.subr.mxu0 0.0
      %1014 = vmatpush1.msra.mxu0 0.0
      %1015 = vmatprep.subr.mxu0 0.0
      %1016 = vmatpush1.msra.mxu0 0.0
      %1017 = vmatprep.subr.mxu0 0.0
      %1018 = vmatpush1.msra.mxu0 0.0
      %1019 = vmatprep.subr.mxu0 0.0
      %1020 = vmatpush1.msra.mxu0 0.0
      %1021 = vmatprep.subr.mxu0 0.0
      %1022 = vmatpush1.msra.mxu0 0.0
      %1023 = vmatprep.subr.mxu0 0.0
      %1024 = vmatpush1.msra.mxu0 0.0
      %1025 = vmatprep.subr.mxu0 0.0
      %1026 = vmatpush1.msra.mxu0 0.0
      %1027 = vmatprep.subr.mxu0 0.0
      %1028 = vmatpush1.msra.mxu0 0.0
      %1029 = vmatprep.subr.mxu0 0.0
      %1030 = vmatpush1.msra.mxu0 0.0
      %1031 = vmatprep.subr.mxu0 0.0
      %1032 = vmatpush1.msra.mxu0 0.0
      %1033 = vmatprep.subr.mxu0 0.0
      %1034 = vmatpush1.msra.mxu0 0.0
      %1035 = vmatprep.subr.mxu0 0.0
      %1036 = vmatpush1.msra.mxu0 0.0
      %1037 = vmatprep.subr.mxu0 0.0
      %1038 = vmatpush1.msra.mxu0 0.0
      %1039 = vmatprep.subr.mxu0 0.0
      %1040 = vmatpush1.msra.mxu0 0.0
      %1041 = vmatprep.subr.mxu0 0.0
      %1042 = vmatpush1.msra.mxu0 0.0
      %1043 = vmatprep.mubr.f32.mxu0 0.0
      %1044 = vmatmul.mubr.f32.gmra.mrb[0].mxu0 %v412
      %v1045 = vpop.f32.mrb[0].mxu0
      %v1046 = vadd.f32 0.0, %v1045
      %v1047 = vpop.f32.mrb[0].mxu0
      %1048 = vmatprep.mubr.f32.mxu0 0.0
      %1049 = vmatmul.mubr.f32.gmra.mrb[0].mxu0 %v415
      %v1050 = vpop.f32.mrb[0].mxu0
      %v1051 = vadd.f32 0.0, %v1050
      %v1052 = vpop.f32.mrb[0].mxu0
      %1053 = vdwg.mxu0
      %s1054 = scalar_lea.vmem %s3, 96
      %v1055 = vld [vmem:[%s1054] sm:$0xff]
      %v1056 = vld [vmem:[%s1054 + $0x8] sm:$0xff]
      %v1057 = vld [vmem:[%s1054 + $0x10] sm:$0xff]
      %v1058 = vld [vmem:[%s1054 + $0x18] sm:$0xff]
      %v1060 = vsel %vm496, %v1055, 0
      %v1063 = vsel %vm496, %v1056, 0
      %v1066 = vsel %vm496, %v1057, 0
      %v1069 = vsel %vm496, %v1058, 0
      %v1072 = vsel %vm509, %v1051, 0
      %1074 = vmatprep.subr.mxu0 0.0
      %1075 = vmatpush1.msra.mxu0 %v1046
      %1076 = vmatprep.subr.mxu0 0.0
      %1077 = vmatpush1.msra.mxu0 %v1072
      %1078 = vmatprep.subr.mxu0 0.0
      %1079 = vmatpush1.msra.mxu0 0.0
      %1080 = vmatprep.subr.mxu0 0.0
      %1081 = vmatpush1.msra.mxu0 0.0
      %1082 = vmatprep.subr.mxu0 0.0
      %1083 = vmatpush1.msra.mxu0 0.0
      %1084 = vmatprep.subr.mxu0 0.0
      %1085 = vmatpush1.msra.mxu0 0.0
      %1086 = vmatprep.subr.mxu0 0.0
      %1087 = vmatpush1.msra.mxu0 0.0
      %1088 = vmatprep.subr.mxu0 0.0
      %1089 = vmatpush1.msra.mxu0 0.0
      %1090 = vmatprep.subr.mxu0 0.0
      %1091 = vmatpush1.msra.mxu0 0.0
      %1092 = vmatprep.subr.mxu0 0.0
      %1093 = vmatpush1.msra.mxu0 0.0
      %1094 = vmatprep.subr.mxu0 0.0
      %1095 = vmatpush1.msra.mxu0 0.0
      %1096 = vmatprep.subr.mxu0 0.0
      %1097 = vmatpush1.msra.mxu0 0.0
      %1098 = vmatprep.subr.mxu0 0.0
      %1099 = vmatpush1.msra.mxu0 0.0
      %1100 = vmatprep.subr.mxu0 0.0
      %1101 = vmatpush1.msra.mxu0 0.0
      %1102 = vmatprep.subr.mxu0 0.0
      %1103 = vmatpush1.msra.mxu0 0.0
      %1104 = vmatprep.subr.mxu0 0.0
      %1105 = vmatpush1.msra.mxu0 0.0
      %1106 = vmatprep.subr.mxu0 0.0
      %1107 = vmatpush1.msra.mxu0 0.0
      %1108 = vmatprep.subr.mxu0 0.0
      %1109 = vmatpush1.msra.mxu0 0.0
      %1110 = vmatprep.subr.mxu0 0.0
      %1111 = vmatpush1.msra.mxu0 0.0
      %1112 = vmatprep.subr.mxu0 0.0
      %1113 = vmatpush1.msra.mxu0 0.0
      %1114 = vmatprep.subr.mxu0 0.0
      %1115 = vmatpush1.msra.mxu0 0.0
      %1116 = vmatprep.subr.mxu0 0.0
      %1117 = vmatpush1.msra.mxu0 0.0
      %1118 = vmatprep.subr.mxu0 0.0
      %1119 = vmatpush1.msra.mxu0 0.0
      %1120 = vmatprep.subr.mxu0 0.0
      %1121 = vmatpush1.msra.mxu0 0.0
      %1122 = vmatprep.subr.mxu0 0.0
      %1123 = vmatpush1.msra.mxu0 0.0
      %1124 = vmatprep.subr.mxu0 0.0
      %1125 = vmatpush1.msra.mxu0 0.0
      %1126 = vmatprep.subr.mxu0 0.0
      %1127 = vmatpush1.msra.mxu0 0.0
      %1128 = vmatprep.subr.mxu0 0.0
      %1129 = vmatpush1.msra.mxu0 0.0
      %1130 = vmatprep.subr.mxu0 0.0
      %1131 = vmatpush1.msra.mxu0 0.0
      %1132 = vmatprep.subr.mxu0 0.0
      %1133 = vmatpush1.msra.mxu0 0.0
      %1134 = vmatprep.subr.mxu0 0.0
      %1135 = vmatpush1.msra.mxu0 0.0
      %1136 = vmatprep.subr.mxu0 0.0
      %1137 = vmatpush1.msra.mxu0 0.0
      %1138 = vmatprep.mubr.f32.mxu0 0.0
      %1139 = vmatmul.mubr.f32.gmra.mrb[0].mxu0 %v1060
      %v1140 = vpop.f32.mrb[0].mxu0
      %v1141 = vadd.f32 0.0, %v1140
      %v1142 = vpop.f32.mrb[0].mxu0
      %1143 = vmatprep.mubr.f32.mxu0 0.0
      %1144 = vmatmul.mubr.f32.gmra.mrb[0].mxu0 %v1063
      %v1145 = vpop.f32.mrb[0].mxu0
      %v1146 = vadd.f32 0.0, %v1145
      %v1147 = vpop.f32.mrb[0].mxu0
      %1148 = vmatprep.mubr.f32.mxu0 0.0
      %1149 = vmatmul.mubr.f32.gmra.mrb[0].mxu0 %v1066
      %v1150 = vpop.f32.mrb[0].mxu0
      %v1151 = vadd.f32 0.0, %v1150
      %v1152 = vpop.f32.mrb[0].mxu0
      %1153 = vmatprep.mubr.f32.mxu0 0.0
      %1154 = vmatmul.mubr.f32.gmra.mrb[0].mxu0 %v1069
      %v1155 = vpop.f32.mrb[0].mxu0
      %v1156 = vadd.f32 0.0, %v1155
      %v1157 = vpop.f32.mrb[0].mxu0
      %1158 = vdwg.mxu0
      %v1159 = vadd.f32 %v972, %v1141
      %v1160 = vadd.f32 %v973, %v1146
      %v1161 = vadd.f32 %v974, %v1151
      %v1162 = vadd.f32 %v975, %v1156
      %vm1163 = vcmask 7168
      %1164 = vst.msk [vmem:[%s313] sm:$0xff] %vm1163, %v1159
      %1165 = vst.msk [vmem:[%s313 + $0x8] sm:$0xff] %vm1163, %v1160
      %1166 = vst.msk [vmem:[%s313 + $0x10] sm:$0xff] %vm1163, %v1161
      %1167 = vst.msk [vmem:[%s313 + $0x18] sm:$0xff] %vm1163, %v1162
      %vm1168 = vcmask 261120
      %v1170 = vsel %vm1168, %v326, 0
      %v1173 = vsel %vm1168, %v327, 0
      %v1176 = vsel %vm1168, %v328, 0
      %v1179 = vsel %vm1168, %v329, 0
      %1181 = vmatprep.subr.mxu0 0.0
      %1182 = vmatpush1.msra.mxu0 %v1159
      %1183 = vmatprep.subr.mxu0 0.0
      %1184 = vmatpush1.msra.mxu0 %v1160
      %1185 = vmatprep.subr.mxu0 0.0
      %1186 = vmatpush1.msra.mxu0 %v1161
      %1187 = vmatprep.subr.mxu0 0.0
      %1188 = vmatpush1.msra.mxu0 %v1162
      %1189 = vmatprep.subr.mxu0 0.0
      %1190 = vmatpush1.msra.mxu0 0.0
      %1191 = vmatprep.subr.mxu0 0.0
      %1192 = vmatpush1.msra.mxu0 0.0
      %1193 = vmatprep.subr.mxu0 0.0
      %1194 = vmatpush1.msra.mxu0 0.0
      %1195 = vmatprep.subr.mxu0 0.0
      %1196 = vmatpush1.msra.mxu0 0.0
      %1197 = vmatprep.subr.mxu0 0.0
      %1198 = vmatpush1.msra.mxu0 0.0
      %1199 = vmatprep.subr.mxu0 0.0
      %1200 = vmatpush1.msra.mxu0 0.0
      %1201 = vmatprep.subr.mxu0 0.0
      %1202 = vmatpush1.msra.mxu0 0.0
      %1203 = vmatprep.subr.mxu0 0.0
      %1204 = vmatpush1.msra.mxu0 0.0
      %1205 = vmatprep.subr.mxu0 0.0
      %1206 = vmatpush1.msra.mxu0 0.0
      %1207 = vmatprep.subr.mxu0 0.0
      %1208 = vmatpush1.msra.mxu0 0.0
      %1209 = vmatprep.subr.mxu0 0.0
      %1210 = vmatpush1.msra.mxu0 0.0
      %1211 = vmatprep.subr.mxu0 0.0
      %1212 = vmatpush1.msra.mxu0 0.0
      %1213 = vmatprep.subr.mxu0 0.0
      %1214 = vmatpush1.msra.mxu0 0.0
      %1215 = vmatprep.subr.mxu0 0.0
      %1216 = vmatpush1.msra.mxu0 0.0
      %1217 = vmatprep.subr.mxu0 0.0
      %1218 = vmatpush1.msra.mxu0 0.0
      %1219 = vmatprep.subr.mxu0 0.0
      %1220 = vmatpush1.msra.mxu0 0.0
      %1221 = vmatprep.subr.mxu0 0.0
      %1222 = vmatpush1.msra.mxu0 0.0
      %1223 = vmatprep.subr.mxu0 0.0
      %1224 = vmatpush1.msra.mxu0 0.0
      %1225 = vmatprep.subr.mxu0 0.0
      %1226 = vmatpush1.msra.mxu0 0.0
      %1227 = vmatprep.subr.mxu0 0.0
      %1228 = vmatpush1.msra.mxu0 0.0
      %1229 = vmatprep.subr.mxu0 0.0
      %1230 = vmatpush1.msra.mxu0 0.0
      %1231 = vmatprep.subr.mxu0 0.0
      %1232 = vmatpush1.msra.mxu0 0.0
      %1233 = vmatprep.subr.mxu0 0.0
      %1234 = vmatpush1.msra.mxu0 0.0
      %1235 = vmatprep.subr.mxu0 0.0
      %1236 = vmatpush1.msra.mxu0 0.0
      %1237 = vmatprep.subr.mxu0 0.0
      %1238 = vmatpush1.msra.mxu0 0.0
      %1239 = vmatprep.subr.mxu0 0.0
      %1240 = vmatpush1.msra.mxu0 0.0
      %1241 = vmatprep.subr.mxu0 0.0
      %1242 = vmatpush1.msra.mxu0 0.0
      %1243 = vmatprep.subr.mxu0 0.0
      %1244 = vmatpush1.msra.mxu0 0.0
      %1245 = vmatprep.mubr.f32.mxu0 0.0
      %1246 = vmatmul.mubr.f32.gmra.mrb[0].mxu0 %v1170
      %v1247 = vpop.f32.mrb[0].mxu0
      %v1248 = vadd.f32 %v330, %v1247
      %v1249 = vpop.f32.mrb[0].mxu0
      %1250 = vmatprep.mubr.f32.mxu0 0.0
      %1251 = vmatmul.mubr.f32.gmra.mrb[0].mxu0 %v1173
      %v1252 = vpop.f32.mrb[0].mxu0
      %v1253 = vadd.f32 %v331, %v1252
      %v1254 = vpop.f32.mrb[0].mxu0
      %1255 = vmatprep.mubr.f32.mxu0 0.0
      %1256 = vmatmul.mubr.f32.gmra.mrb[0].mxu0 %v1176
      %v1257 = vpop.f32.mrb[0].mxu0
      %v1258 = vadd.f32 %v332, %v1257
      %v1259 = vpop.f32.mrb[0].mxu0
      %1260 = vmatprep.mubr.f32.mxu0 0.0
      %1261 = vmatmul.mubr.f32.gmra.mrb[0].mxu0 %v1179
      %v1262 = vpop.f32.mrb[0].mxu0
      %v1263 = vadd.f32 %v333, %v1262
      %v1264 = vpop.f32.mrb[0].mxu0
      %1265 = vdwg.mxu0
      %1266 = vst.msk [vmem:[%s318] sm:$0xff] %vm1163, %v1248
      %1267 = vst.msk [vmem:[%s318 + $0x8] sm:$0xff] %vm1163, %v1253
      %1268 = vst.msk [vmem:[%s318 + $0x10] sm:$0xff] %vm1163, %v1258
      %1269 = vst.msk [vmem:[%s318 + $0x18] sm:$0xff] %vm1163, %v1263
      %p1270 = scmp.lt.s32.totalorder %s20, 1
      %s1271 = scalar_select %p1270, %s20, 1
      %s1272 = smul.addr %s1271, 4
      %s1273 = smul.addr %s1272, 8
      %s1274 = scalar_lea.vmem %s7, %s1273
      %p1275 = scmp.lt.s32.totalorder %s20, 1
      %s1276 = scalar_select %p1275, %s20, 1
      %s1277 = smul.addr %s1276, 4
      %s1278 = smul.addr %s1277, 8
      %s1279 = scalar_lea.vmem %s8, %s1278
      // Predicated region
      $region49: #{tpu_custom_call.1} parent=47 // pred_check
        %p1280 = pneg %p190
      $region50: #{tpu_custom_call.1} parent=47 // pred_check_branch
        %1282 = sbr.rel (%p1280) target = $region52
      $region51: #{tpu_custom_call.1} parent=47 // pred_region
        _
      $region52: #{tpu_custom_call.1} parent=47 // pred_fallthru
        _
      // Predicated region
      $region53: #{tpu_custom_call.1} parent=47 // pred_check
        %p1283 = pneg %p216
      $region54: #{tpu_custom_call.1} parent=47 // pred_check_branch
        %1285 = sbr.rel (%p1283) target = $region56
      $region55: #{tpu_custom_call.1} parent=47 // pred_region
        _
      $region56: #{tpu_custom_call.1} parent=47 // pred_fallthru
        _
    $region48: #{tpu_custom_call.1} parent=5 // pred_fallthru
      _
    %p1286 = scmp.le.s32.totalorder 2, %s15
    // Predicated region
    $region57: #{tpu_custom_call.1} parent=5 // pred_check
      %p1287 = pneg %p1286
    $region58: #{tpu_custom_call.1} parent=5 // pred_check_branch
      %1289 = sbr.rel (%p1287) target = $region60
    $region59: #{tpu_custom_call.1} parent=5 // pred_region
      %s1290 = ssub.s32 %s15, 2
      // Predicated region
      $region61: #{tpu_custom_call.1} parent=59 // pred_check
        %p1291 = pneg %p196
      $region62: #{tpu_custom_call.1} parent=59 // pred_check_branch
        %1293 = sbr.rel (%p1291) target = $region64
      $region63: #{tpu_custom_call.1} parent=59 // pred_region
        %p1294 = scmp.lt.s32.totalorder %s21, 1
        %s1295 = scalar_select %p1294, %s21, 1
        %s1296 = smul.addr %s1295, 4
        %s1297 = smul.addr %s1296, 8
        %s1298 = scalar_lea.vmem %s7, %s1297
      $region64: #{tpu_custom_call.1} parent=59 // pred_fallthru
        _
      // Predicated region
      $region65: #{tpu_custom_call.1} parent=59 // pred_check
        %p1299 = pneg %p222
      $region66: #{tpu_custom_call.1} parent=59 // pred_check_branch
        %1301 = sbr.rel (%p1299) target = $region68
      $region67: #{tpu_custom_call.1} parent=59 // pred_region
        %p1302 = scmp.lt.s32.totalorder %s21, 1
        %s1303 = scalar_select %p1302, %s21, 1
        %s1304 = smul.addr %s1303, 4
        %s1305 = smul.addr %s1304, 8
        %s1306 = scalar_lea.vmem %s8, %s1305
      $region68: #{tpu_custom_call.1} parent=59 // pred_fallthru
        _
    $region60: #{tpu_custom_call.1} parent=5 // pred_fallthru
      _
  $region6: #{tpu_custom_call.1} parent=0 // loop_footer
    %s19 = sadd.s32 1, %s15
  $region7: #{tpu_custom_call.1} parent=0 // loop_footer_branch
    %14 = sbr.rel target = $region3
  $region8: #{tpu_custom_call.1} parent=0 // loop_exit
    _

</llo_original>
